<compile_context>
chip_gen: v7x
topology: tpu7x:2x2x1
jax: 0.10.0
libtpu: 0.0.40
codegen_flags: <defaults>
</compile_context>

<pallas_src>
import jax
import jax.numpy as jnp
from jax.experimental import pallas as pl
from jax.experimental.pallas import tpu as pltpu

_F32 = 4  # bytes


def _round_up(x, m):
    return ((x + m - 1) // m) * m


def _attn_kernel(q_ref, k_ref, krn_ref, out_ref, qhat_ref):
    # q_ref:   (TB, Hp) f32   queries (fetched once per B tile)
    # k_ref:   (TL, Hp) f32   key tile
    # krn_ref: (1,  TL) f32   1/||k_i|| row (padded rows pre-masked to 0)
    # out_ref: (TB, Hp) f32   resident accumulator across the L grid axis
    # qhat_ref:(TB, Hp) f32   VMEM scratch holding normalized queries
    li = pl.program_id(1)

    @pl.when(li == 0)
    def _init():
        q = q_ref[...]
        # 1/||q|| on the EUP (rsqrt, no divide); normalize once per B tile.
        qhat_ref[...] = q * jax.lax.rsqrt(
            jnp.sum(q * q, axis=-1, keepdims=True))
        out_ref[...] = jnp.zeros_like(out_ref)

    k = k_ref[...]                                                 # (TL, Hp)

    # Cosine scores: contract over H on the MXU, then scale by the
    # precomputed reciprocal key norms (broadcast over the TB sublanes).
    s = jax.lax.dot_general(
        qhat_ref[...], k,
        dimension_numbers=(((1,), (1,)), ((), ())),
        preferred_element_type=jnp.float32)                        # (TB, TL)
    cos = s * krn_ref[...]                                         # (TB, TL)

    # context += cos @ K : L-reduction on the MXU, accumulated in the resident
    # f32 output block (finalized automatically when the B tile changes).
    out_ref[...] += jnp.dot(cos, k, preferred_element_type=jnp.float32)


def bahdanau_attention_batched(queries, keys):
    """queries: (B, H) f32, keys: (L, H) f32 -> contexts (B, H) f32.

    contexts[b] = sum_i cos(queries[b], keys[i]) * keys[i]
    """
    B, H = queries.shape
    L, Hk = keys.shape
    assert H == Hk, "query / key hidden sizes must match"

    queries = queries.astype(jnp.float32)
    keys = keys.astype(jnp.float32)
    # TODO(synk): opt-in bf16 key/query streaming (f32 accumulate) would halve
    # HBM traffic and hit the bf16 MXU rate, but changes numerics vs the f32
    # PyTorch forward, so f32 parity is kept here.

    Hp = _round_up(max(H, 128), 128)          # lane-dense last dim
    L8 = _round_up(max(L, 8), 8)
    B8 = _round_up(max(B, 8), 8)

    # ---- key tile (TL): fully VMEM-resident when it fits. --------------------
    KEY_RESIDENT_BUDGET = 24 << 20            # double-buffered resident block
    KEY_TILE_BUDGET = 8 << 20                 # per key-tile buffer (streaming)
    if 2 * L8 * Hp * _F32 <= KEY_RESIDENT_BUDGET:
        TL = L8                               # block index constant -> 1 fetch
        Lp = L8
    else:
        # Large, 128-aligned key tile (krn row's lane dim must be 128-aligned).
        TL = max(128, min(2048, (KEY_TILE_BUDGET // (Hp * _F32)) // 128 * 128))
        Lp = _round_up(L8, TL)

    # ---- query tile (TB): >=2 parallel tiles when B allows (v7x 2 TCs), -----
    # capped at 256 (v6e/v7x MXU tiling) and by a per-buffer VMEM budget.
    TB_vmem_cap = max(8, ((4 << 20) // (Hp * _F32)) // 8 * 8)
    if B8 <= 8:
        TB = 8
    else:
        TB = min(256, _round_up((B8 + 1) // 2, 8), TB_vmem_cap, B8)
    Bp = _round_up(B8, TB)

    # ---- padded operands (skip the copy when already aligned). ---------------
    if (Bp, Hp) == (B, H):
        q_p = queries
    else:
        q_p = jnp.zeros((Bp, Hp), jnp.float32).at[:B, :H].set(queries)
    if (Lp, Hp) == (L, H):
        k_p = keys
    else:
        k_p = jnp.zeros((Lp, Hp), jnp.float32).at[:L, :H].set(keys)

    # Precomputed reciprocal key norms, lane-dense row; padded rows masked to 0
    # so they contribute nothing (and rsqrt(0)=inf never reaches the kernel).
    krn = jax.lax.rsqrt(jnp.sum(keys * keys, axis=-1))             # (L,)
    if Lp == L:
        krn_row = krn.reshape(1, L)
    else:
        krn_row = jnp.zeros((1, Lp), jnp.float32).at[0, :L].set(krn)

    grid = (Bp // TB, Lp // TL)               # (parallel B tiles, L innermost)

    # ---- explicit VMEM budget (v5e 16 MiB scoped default, v7x 64 MiB phys). --
    vmem_bytes = _F32 * (2 * TB * Hp          # queries (double-buffered)
                         + 2 * TL * Hp        # keys
                         + 2 * 8 * TL         # krn row (8-sublane padded)
                         + 2 * TB * Hp        # output block
                         + TB * Hp)           # q_hat scratch
    vmem_limit = min(64 << 20,
                     max(16 << 20, vmem_bytes + vmem_bytes // 4 + (2 << 20)))

    key_passes = 1 if TL == Lp else (Bp // TB)
    cost = pl.CostEstimate(
        flops=4 * Bp * Lp * Hp,               # two (B,L,H) MXU contractions
        transcendentals=Bp,                   # in-kernel rsqrt per query row
        bytes_accessed=_F32 * (Bp * Hp                # queries
                               + key_passes * Lp * Hp # keys
                               + Lp                   # krn row
                               + Bp * Hp))            # output

    ctx_p = pl.pallas_call(
        _attn_kernel,
        out_shape=jax.ShapeDtypeStruct((Bp, Hp), jnp.float32),
        grid=grid,
        in_specs=[
            pl.BlockSpec((TB, Hp), lambda bi, li: (bi, 0)),   # queries
            pl.BlockSpec((TL, Hp), lambda bi, li: (li, 0)),   # keys
            pl.BlockSpec((1, TL), lambda bi, li: (0, li)),    # 1/||k|| row
        ],
        out_specs=pl.BlockSpec((TB, Hp), lambda bi, li: (bi, 0)),
        scratch_shapes=[pltpu.VMEM((TB, Hp), jnp.float32)],   # q_hat stash
        compiler_params=pltpu.CompilerParams(
            dimension_semantics=("parallel", "arbitrary"),
            vmem_limit_bytes=int(vmem_limit)),
        cost_estimate=cost,
    )(q_p, k_p, krn_row)

    # Drop H padding and padded (all-zero, NaN) query rows.
    return ctx_p[:B, :H]


def bahdanau_attention(query, keys):
    """Module-shaped API: query (1, 1, H), keys (L, 1, H) -> context (1, 1, H)."""
    H = query.shape[-1]
    L = keys.shape[0]
    ctx = bahdanau_attention_batched(query.reshape(1, H), keys.reshape(L, H))
    return ctx.reshape(1, 1, H)   # matches context.unsqueeze(0)


def init_params(hidden_size, key):
    """Deterministic init of the module's Linear params (unused in forward)."""
    k1, k2, k3, k4, k5, k6 = jax.random.split(key, 6)
    bound = 1.0 / jnp.sqrt(hidden_size)
    params = {
        "Wa_w": jax.random.uniform(k1, (hidden_size, hidden_size), jnp.float32, -bound, bound),
        "Wa_b": jax.random.uniform(k2, (hidden_size,), jnp.float32, -bound, bound),
        "Ua_w": jax.random.uniform(k3, (hidden_size, hidden_size), jnp.float32, -bound, bound),
        "Ua_b": jax.random.uniform(k4, (hidden_size,), jnp.float32, -bound, bound),
        "Va_w": jax.random.uniform(k5, (1, hidden_size), jnp.float32, -bound, bound),
        "Va_b": jax.random.uniform(k6, (1,), jnp.float32, -bound, bound),
    }
    # TODO(synk): Wa/Ua/Va are never used in the PyTorch forward(); initialized
    # for parity but intentionally not consumed by the kernel.
    return params


if __name__ == "__main__":
    HIDDEN = 32
    SEQ = 8
    BATCH = 4   # decoder steps batched into a single pallas_call

    root = jax.random.PRNGKey(0)
    k_params, k_q, k_k = jax.random.split(root, 3)

    _ = init_params(HIDDEN, k_params)   # unused in forward, kept for fidelity

    keys3d = jax.random.normal(k_k, (SEQ, 1, HIDDEN), dtype=jnp.float32)
    queries = jax.random.normal(k_q, (BATCH, HIDDEN), dtype=jnp.float32)

    # Batched path: many decoder steps per launch.
    ctx_batched = bahdanau_attention_batched(queries, keys3d.reshape(SEQ, HIDDEN))
    jax.block_until_ready(ctx_batched)

    # Module-shaped single-query path.
    query = queries[0].reshape(1, 1, HIDDEN)
    ctx_single = bahdanau_attention(query, keys3d)
    jax.block_until_ready(ctx_single)

    # Pure-JAX reference of the same math.
    kv = keys3d.reshape(SEQ, HIDDEN)
    k_norm = jnp.linalg.norm(kv, axis=-1)

    def ref_one(q):
        cos = (kv @ q) / (jnp.linalg.norm(q) * k_norm)
        return jnp.sum(cos[:, None] * kv, axis=0)

    ref_batched = jax.vmap(ref_one)(queries)

    assert ctx_batched.shape == (BATCH, HIDDEN)
    assert ctx_single.shape == (1, 1, HIDDEN)
    assert bool(jnp.allclose(ctx_batched, ref_batched, atol=1e-4, rtol=1e-4))
    assert bool(jnp.allclose(ctx_single.reshape(HIDDEN), ref_batched[0],
                             atol=1e-4, rtol=1e-4))

    print("KERNEL_OK")
</pallas_src>

<mosaic_0001>
module attributes {stable_mosaic.version = 11 : i64} {
  func.func @_attn_kernel(%arg0: i32, %arg1: i32, %arg2: memref<8x128xf32, #tpu.memory_space<vmem>>, %arg3: memref<8x128xf32, #tpu.memory_space<vmem>>, %arg4: memref<1x8xf32, #tpu.memory_space<vmem>>, %arg5: memref<8x128xf32, #tpu.memory_space<vmem>>, %arg6: memref<8x128xf32, #tpu.memory_space<vmem>>) attributes {dimension_semantics = [#tpu.dimension_semantics<parallel>, #tpu.dimension_semantics<arbitrary>], iteration_bounds = array<i64: 1, 1>, scalar_prefetch = 0 : i64, scratch_operands = 1 : i64, tpu.core_type = #tpu.core_type<tc>, window_params = [{transform_indices = @transform_0, window_bounds = array<i64: 8, 128>}, {transform_indices = @transform_1, window_bounds = array<i64: 8, 128>}, {transform_indices = @transform_2, window_bounds = array<i64: 1, 8>}, {transform_indices = @transform_3, window_bounds = array<i64: 8, 128>}]} {
    %c0_i32 = arith.constant 0 : i32
    %0 = arith.cmpi eq, %arg1, %c0_i32 : i32
    %1 = arith.extui %0 : i1 to i32
    %c0_i32_0 = arith.constant 0 : i32
    %2 = arith.cmpi ne, %1, %c0_i32_0 : i32
    scf.if %2 {
      %c0_11 = arith.constant 0 : index
      %c0_12 = arith.constant 0 : index
      %13 = vector.load %arg2[%c0_11, %c0_12] : memref<8x128xf32, #tpu.memory_space<vmem>>, vector<8x128xf32>
      %14 = arith.mulf %13, %13 : vector<8x128xf32>
      %cst_13 = arith.constant dense<0.000000e+00> : vector<8xf32>
      %15 = vector.multi_reduction <add>, %14, %cst_13 [1] : vector<8x128xf32> to vector<8xf32>
      %16 = vector.shape_cast %15 : vector<8xf32> to vector<8x1xf32>
      %17 = math.rsqrt %16 : vector<8x1xf32>
      %18 = vector.broadcast %17 : vector<8x1xf32> to vector<8x128xf32>
      %19 = arith.mulf %13, %18 : vector<8x128xf32>
      %c0_14 = arith.constant 0 : index
      %c0_15 = arith.constant 0 : index
      %20 = vector.load %arg6[%c0_14, %c0_15] : memref<8x128xf32, #tpu.memory_space<vmem>>, vector<8x128xf32>
      tpu.vector_store %arg6[%c0_14, %c0_15], %19 {strides = array<i32>} : memref<8x128xf32, #tpu.memory_space<vmem>>, vector<8x128xf32>,
      %cst_16 = arith.constant 0.000000e+00 : f32
      %21 = vector.broadcast %cst_16 : f32 to vector<8x128xf32>
      %c0_17 = arith.constant 0 : index
      %c0_18 = arith.constant 0 : index
      %22 = vector.load %arg5[%c0_17, %c0_18] : memref<8x128xf32, #tpu.memory_space<vmem>>, vector<8x128xf32>
      tpu.vector_store %arg5[%c0_17, %c0_18], %21 {strides = array<i32>} : memref<8x128xf32, #tpu.memory_space<vmem>>, vector<8x128xf32>,
    } else {
    }
    %c0 = arith.constant 0 : index
    %c0_1 = arith.constant 0 : index
    %3 = vector.load %arg3[%c0, %c0_1] : memref<8x128xf32, #tpu.memory_space<vmem>>, vector<8x128xf32>
    %c0_2 = arith.constant 0 : index
    %c0_3 = arith.constant 0 : index
    %4 = vector.load %arg6[%c0_2, %c0_3] : memref<8x128xf32, #tpu.memory_space<vmem>>, vector<8x128xf32>
    %cst = arith.constant dense<0.000000e+00> : vector<8x8xf32>
    %5 = tpu.matmul %4, %3, %cst {dimension_numbers = #tpu.dot_dimension_numbers<[1], [1], [0], [0], [0, 0, 1, 0], [], []>} : vector<8x128xf32>, vector<8x128xf32>, vector<8x8xf32> -> vector<8x8xf32>
    %c0_4 = arith.constant 0 : index
    %c0_5 = arith.constant 0 : index
    %6 = vector.load %arg4[%c0_4, %c0_5] : memref<1x8xf32, #tpu.memory_space<vmem>>, vector<1x8xf32>
    %7 = vector.broadcast %6 : vector<1x8xf32> to vector<8x8xf32>
    %8 = arith.mulf %5, %7 : vector<8x8xf32>
    %c0_6 = arith.constant 0 : index
    %c0_7 = arith.constant 0 : index
    %9 = vector.load %arg5[%c0_6, %c0_7] : memref<8x128xf32, #tpu.memory_space<vmem>>, vector<8x128xf32>
    %cst_8 = arith.constant dense<0.000000e+00> : vector<8x128xf32>
    %10 = tpu.matmul %8, %3, %cst_8 {dimension_numbers = #tpu.dot_dimension_numbers<[1], [0], [0], [1], [0, 0, 1, 1], [], []>} : vector<8x8xf32>, vector<8x128xf32>, vector<8x128xf32> -> vector<8x128xf32>
    %11 = arith.addf %9, %10 : vector<8x128xf32>
    %c0_9 = arith.constant 0 : index
    %c0_10 = arith.constant 0 : index
    %12 = vector.load %arg5[%c0_9, %c0_10] : memref<8x128xf32, #tpu.memory_space<vmem>>, vector<8x128xf32>
    tpu.vector_store %arg5[%c0_9, %c0_10], %11 {strides = array<i32>} : memref<8x128xf32, #tpu.memory_space<vmem>>, vector<8x128xf32>,
    return
  }
  func.func @transform_0(%arg0: i32, %arg1: i32) -> (i32, i32) {
    %c0_i32 = arith.constant 0 : i32
    %c0_i32_0 = arith.constant 0 : i32
    return %arg0, %c0_i32 : i32, i32
  }
  func.func @transform_1(%arg0: i32, %arg1: i32) -> (i32, i32) {
    %c0_i32 = arith.constant 0 : i32
    %c0_i32_0 = arith.constant 0 : i32
    return %arg1, %c0_i32 : i32, i32
  }
  func.func @transform_2(%arg0: i32, %arg1: i32) -> (i32, i32) {
    %c0_i32 = arith.constant 0 : i32
    %c0_i32_0 = arith.constant 0 : i32
    return %c0_i32, %arg1 : i32, i32
  }
  func.func @transform_3(%arg0: i32, %arg1: i32) -> (i32, i32) {
    %c0_i32 = arith.constant 0 : i32
    %c0_i32_0 = arith.constant 0 : i32
    return %arg0, %c0_i32 : i32, i32
  }
}

</mosaic_0001>

<llo_original>
// kernel: tpu_custom_call.1
$region0: #{tpu_custom_call.1}
  #allocation0 [shape = 'u32[]', space=smem, size = 0x4, offset = 0x4, fixed_abs, tag = 'smem constant byte address 0x4 - core index']
  #allocation1 [shape = 'u32[144,128]{1,0:T(1,128)}', space=vmem, size = 0x12000, scoped, tag = 'internal scratch']
  #allocation2 [shape = 'f32[8,128]{1,0:T(8,128)}', space=vmem, size = 0x1000, scoped, tag = 'scratch operand']
  %s0 = inlined_call_operand.hbm [shape: f32[8,128], index: 0, kind: input, shape index: {}]
  %s1 = inlined_call_operand.hbm [shape: f32[8,128], index: 1, kind: input, shape index: {}]
  %s2 = inlined_call_operand.vmem [shape: f32[1,8], index: 2, kind: input, shape index: {}]
  %s3 = inlined_call_operand.hbm [shape: f32[8,128], index: 3, kind: output, shape index: {}]
  %s4 = sld [smem:[#allocation0]]
  $region34: #{tpu_custom_call.1} parent=0
    _
  %s6 = ssub.s32 1, %s4
  %s7 = scalar_select 0, %s6, %s4
  $region1: #{tpu_custom_call.1} parent=0
    #allocation3 [shape = 'u8[4096]{0}', space=vmem, size = 0x1000, scoped, tag = 'input window, operand 0, single buffered']
    #allocation4 [shape = 's32[1]{0}', space=sflag, size = 0x4, scoped, tag = 'scoped memory for tpu_custom_call.1']
    #allocation5 [shape = 's32[1]{0}', space=sflag, size = 0x4, scoped, tag = 'scoped memory for tpu_custom_call.1']
    #allocation6 [shape = 'u8[4096]{0}', space=vmem, size = 0x1000, scoped, tag = 'input window, operand 1, single buffered']
    #allocation7 [shape = 's32[1]{0}', space=sflag, size = 0x4, scoped, tag = 'scoped memory for tpu_custom_call.1']
    #allocation8 [shape = 'u8[4096]{0}', space=vmem, size = 0x1000, scoped, tag = 'output window, operand 0, single buffered']
    %8 = vsyncpa [#allocation4], 0
    %9 = vsyncpa [#allocation7], 0
    %10 = vsyncpa [#allocation5], 0
    // Predicated region
    $region2: #{tpu_custom_call.1} parent=1 // pred_check
      _
    $region3: #{tpu_custom_call.1} parent=1 // pred_check_branch
      %12 = sbr.rel (0) target = $region5
    $region4: #{tpu_custom_call.1} parent=1 // pred_region
      %s14 = ssub.s32 128, 128
      %15 = vsyncadd [#allocation4], %s14
      %s17 = sshll.u32 [#allocation3], 4
      %s18 = int_to_ptr.vmem [resolvable:$true] %s17
      %20 = dma.hbm_to_vmem [thread:$0]  %s0, 128, %s18, [#allocation4]
    $region5: #{tpu_custom_call.1} parent=1 // pred_fallthru
      _
    // Predicated region
    $region6: #{tpu_custom_call.1} parent=1 // pred_check
      _
    $region7: #{tpu_custom_call.1} parent=1 // pred_check_branch
      %22 = sbr.rel (0) target = $region9
    $region8: #{tpu_custom_call.1} parent=1 // pred_region
      %s24 = ssub.s32 128, 128
      %25 = vsyncadd [#allocation7], %s24
      %s27 = sshll.u32 [#allocation6], 4
      %s28 = int_to_ptr.vmem [resolvable:$true] %s27
      %30 = dma.hbm_to_vmem [thread:$0]  %s1, 128, %s28, [#allocation7]
    $region9: #{tpu_custom_call.1} parent=1 // pred_fallthru
      _
    // Predicated region
    $region10: #{tpu_custom_call.1} parent=1 // pred_check
      _
    $region11: #{tpu_custom_call.1} parent=1 // pred_check_branch
      %32 = sbr.rel (0) target = $region13
    $region12: #{tpu_custom_call.1} parent=1 // pred_region
      _
    $region13: #{tpu_custom_call.1} parent=1 // pred_fallthru
      _
    // Predicated region
    $region14: #{tpu_custom_call.1} parent=1 // pred_check
      _
    $region15: #{tpu_custom_call.1} parent=1 // pred_check_branch
      %34 = sbr.rel (0) target = $region17
    $region16: #{tpu_custom_call.1} parent=1 // pred_region
      %35 = dma.done [#allocation4], 128
    $region17: #{tpu_custom_call.1} parent=1 // pred_fallthru
      _
    // Predicated region
    $region18: #{tpu_custom_call.1} parent=1 // pred_check
      _
    $region19: #{tpu_custom_call.1} parent=1 // pred_check_branch
      %37 = sbr.rel (0) target = $region21
    $region20: #{tpu_custom_call.1} parent=1 // pred_region
      %38 = dma.done [#allocation7], 128
    $region21: #{tpu_custom_call.1} parent=1 // pred_fallthru
      _
    %p39 = scmp.eq.s32.totalorder 0, 0
    // Predicated region
    $region22: #{tpu_custom_call.1} parent=1 // pred_check
      %p40 = pneg %p39
    $region23: #{tpu_custom_call.1} parent=1 // pred_check_branch
      %42 = sbr.rel (%p40) target = $region25
    $region24: #{tpu_custom_call.1} parent=1 // pred_region
      %v43 = vld [vmem:[#allocation3] sm:$0xff]
      %v44 = vmul.f32 %v43, %v43
      %45 = vadd.xlane.f32.xlu0 %v44
      %v46 = vpop.xlane.xlu0 %45
      %v47 = vrsqrt.pop %v46
      %v48 = vmul.f32 %v43, %v47
      %49 = vst [vmem:[#allocation2] sm:$0xff] %v48
      %50 = vst [vmem:[#allocation8] sm:$0xff] 0.0
    $region25: #{tpu_custom_call.1} parent=1 // pred_fallthru
      _
    %v51 = vld [vmem:[#allocation6] sm:$0xff]
    %v52 = vld [vmem:[#allocation2] sm:$0xff]
    %53 = vmatprep.subr.mxu0 0.0
    %54 = vmatpush1.xpose.msra.mxu0 %v51
    %55 = vmatprep.subr.mxu0 0.0
    %56 = vmatpush1.xpose.msra.mxu0 0.0
    %57 = vmatprep.subr.mxu0 0.0
    %58 = vmatpush1.xpose.msra.mxu0 0.0
    %59 = vmatprep.subr.mxu0 0.0
    %60 = vmatpush1.xpose.msra.mxu0 0.0
    %61 = vmatprep.subr.mxu0 0.0
    %62 = vmatpush1.xpose.msra.mxu0 0.0
    %63 = vmatprep.subr.mxu0 0.0
    %64 = vmatpush1.xpose.msra.mxu0 0.0
    %65 = vmatprep.subr.mxu0 0.0
    %66 = vmatpush1.xpose.msra.mxu0 0.0
    %67 = vmatprep.subr.mxu0 0.0
    %68 = vmatpush1.xpose.msra.mxu0 0.0
    %69 = vmatprep.subr.mxu0 0.0
    %70 = vmatpush1.xpose.msra.mxu0 0.0
    %71 = vmatprep.subr.mxu0 0.0
    %72 = vmatpush1.xpose.msra.mxu0 0.0
    %73 = vmatprep.subr.mxu0 0.0
    %74 = vmatpush1.xpose.msra.mxu0 0.0
    %75 = vmatprep.subr.mxu0 0.0
    %76 = vmatpush1.xpose.msra.mxu0 0.0
    %77 = vmatprep.subr.mxu0 0.0
    %78 = vmatpush1.xpose.msra.mxu0 0.0
    %79 = vmatprep.subr.mxu0 0.0
    %80 = vmatpush1.xpose.msra.mxu0 0.0
    %81 = vmatprep.subr.mxu0 0.0
    %82 = vmatpush1.xpose.msra.mxu0 0.0
    %83 = vmatprep.subr.mxu0 0.0
    %84 = vmatpush1.xpose.msra.mxu0 0.0
    %85 = vmatprep.subr.mxu0 0.0
    %86 = vmatpush1.xpose.msra.mxu0 0.0
    %87 = vmatprep.subr.mxu0 0.0
    %88 = vmatpush1.xpose.msra.mxu0 0.0
    %89 = vmatprep.subr.mxu0 0.0
    %90 = vmatpush1.xpose.msra.mxu0 0.0
    %91 = vmatprep.subr.mxu0 0.0
    %92 = vmatpush1.xpose.msra.mxu0 0.0
    %93 = vmatprep.subr.mxu0 0.0
    %94 = vmatpush1.xpose.msra.mxu0 0.0
    %95 = vmatprep.subr.mxu0 0.0
    %96 = vmatpush1.xpose.msra.mxu0 0.0
    %97 = vmatprep.subr.mxu0 0.0
    %98 = vmatpush1.xpose.msra.mxu0 0.0
    %99 = vmatprep.subr.mxu0 0.0
    %100 = vmatpush1.xpose.msra.mxu0 0.0
    %101 = vmatprep.subr.mxu0 0.0
    %102 = vmatpush1.xpose.msra.mxu0 0.0
    %103 = vmatprep.subr.mxu0 0.0
    %104 = vmatpush1.xpose.msra.mxu0 0.0
    %105 = vmatprep.subr.mxu0 0.0
    %106 = vmatpush1.xpose.msra.mxu0 0.0
    %107 = vmatprep.subr.mxu0 0.0
    %108 = vmatpush1.xpose.msra.mxu0 0.0
    %109 = vmatprep.subr.mxu0 0.0
    %110 = vmatpush1.xpose.msra.mxu0 0.0
    %111 = vmatprep.subr.mxu0 0.0
    %112 = vmatpush1.xpose.msra.mxu0 0.0
    %113 = vmatprep.subr.mxu0 0.0
    %114 = vmatpush1.xpose.msra.mxu0 0.0
    %115 = vmatprep.subr.mxu0 0.0
    %116 = vmatpush1.xpose.msra.mxu0 0.0
    %117 = vmatprep.mubr.f32.mxu0 0.0
    %118 = vmatmul.mubr.f32.gmra.mrb[0].mxu0 %v52
    %v119 = vpop.f32.mrb[0].mxu0
    %v120 = vadd.f32 0.0, %v119
    %v121 = vpop.f32.mrb[0].mxu0
    %122 = vdwg.mxu0
    %v123 = vld [vmem:[%s2] sm:$0x1]
    %v125 = vlaneseq
    %v126 = vshrl.u32 %v125, 7
    %v127 = vsub.s32 0, %v126
    %v128 = vrot.slane %v123, %v127
    %v130 = vmul.f32 %v120, %v128
    %v131 = vld [vmem:[#allocation8] sm:$0xff]
    %vm132 = vcmask 64512
    %v134 = vsel %vm132, %v130, 0
    %136 = vmatprep.subr.mxu0 0.0
    %137 = vmatpush1.msra.mxu0 %v51
    %138 = vmatprep.subr.mxu0 0.0
    %139 = vmatpush1.msra.mxu0 0.0
    %140 = vmatprep.subr.mxu0 0.0
    %141 = vmatpush1.msra.mxu0 0.0
    %142 = vmatprep.subr.mxu0 0.0
    %143 = vmatpush1.msra.mxu0 0.0
    %144 = vmatprep.subr.mxu0 0.0
    %145 = vmatpush1.msra.mxu0 0.0
    %146 = vmatprep.subr.mxu0 0.0
    %147 = vmatpush1.msra.mxu0 0.0
    %148 = vmatprep.subr.mxu0 0.0
    %149 = vmatpush1.msra.mxu0 0.0
    %150 = vmatprep.subr.mxu0 0.0
    %151 = vmatpush1.msra.mxu0 0.0
    %152 = vmatprep.subr.mxu0 0.0
    %153 = vmatpush1.msra.mxu0 0.0
    %154 = vmatprep.subr.mxu0 0.0
    %155 = vmatpush1.msra.mxu0 0.0
    %156 = vmatprep.subr.mxu0 0.0
    %157 = vmatpush1.msra.mxu0 0.0
    %158 = vmatprep.subr.mxu0 0.0
    %159 = vmatpush1.msra.mxu0 0.0
    %160 = vmatprep.subr.mxu0 0.0
    %161 = vmatpush1.msra.mxu0 0.0
    %162 = vmatprep.subr.mxu0 0.0
    %163 = vmatpush1.msra.mxu0 0.0
    %164 = vmatprep.subr.mxu0 0.0
    %165 = vmatpush1.msra.mxu0 0.0
    %166 = vmatprep.subr.mxu0 0.0
    %167 = vmatpush1.msra.mxu0 0.0
    %168 = vmatprep.subr.mxu0 0.0
    %169 = vmatpush1.msra.mxu0 0.0
    %170 = vmatprep.subr.mxu0 0.0
    %171 = vmatpush1.msra.mxu0 0.0
    %172 = vmatprep.subr.mxu0 0.0
    %173 = vmatpush1.msra.mxu0 0.0
    %174 = vmatprep.subr.mxu0 0.0
    %175 = vmatpush1.msra.mxu0 0.0
    %176 = vmatprep.subr.mxu0 0.0
    %177 = vmatpush1.msra.mxu0 0.0
    %178 = vmatprep.subr.mxu0 0.0
    %179 = vmatpush1.msra.mxu0 0.0
    %180 = vmatprep.subr.mxu0 0.0
    %181 = vmatpush1.msra.mxu0 0.0
    %182 = vmatprep.subr.mxu0 0.0
    %183 = vmatpush1.msra.mxu0 0.0
    %184 = vmatprep.subr.mxu0 0.0
    %185 = vmatpush1.msra.mxu0 0.0
    %186 = vmatprep.subr.mxu0 0.0
    %187 = vmatpush1.msra.mxu0 0.0
    %188 = vmatprep.subr.mxu0 0.0
    %189 = vmatpush1.msra.mxu0 0.0
    %190 = vmatprep.subr.mxu0 0.0
    %191 = vmatpush1.msra.mxu0 0.0
    %192 = vmatprep.subr.mxu0 0.0
    %193 = vmatpush1.msra.mxu0 0.0
    %194 = vmatprep.subr.mxu0 0.0
    %195 = vmatpush1.msra.mxu0 0.0
    %196 = vmatprep.subr.mxu0 0.0
    %197 = vmatpush1.msra.mxu0 0.0
    %198 = vmatprep.subr.mxu0 0.0
    %199 = vmatpush1.msra.mxu0 0.0
    %200 = vmatprep.mubr.f32.mxu0 0.0
    %201 = vmatmul.mubr.f32.gmra.mrb[0].mxu0 %v134
    %v202 = vpop.f32.mrb[0].mxu0
    %v203 = vadd.f32 0.0, %v202
    %v204 = vpop.f32.mrb[0].mxu0
    %205 = vdwg.mxu0
    %v206 = vadd.f32 %v131, %v203
    %207 = vst [vmem:[#allocation8] sm:$0xff] %v206
    // Predicated region
    $region26: #{tpu_custom_call.1} parent=1 // pred_check
      _
    $region27: #{tpu_custom_call.1} parent=1 // pred_check_branch
      %209 = sbr.rel (0) target = $region29
    $region28: #{tpu_custom_call.1} parent=1 // pred_region
      %s211 = ssub.s32 128, 128
      %212 = vsyncadd [#allocation5], %s211
      %s214 = sshll.u32 [#allocation8], 4
      %s215 = int_to_ptr.vmem [resolvable:$true] %s214
      %217 = dma.vmem_to_hbm [thread:$0]  %s215, 128, %s3, [#allocation5]
    $region29: #{tpu_custom_call.1} parent=1 // pred_fallthru
      _
    // Predicated region
    $region30: #{tpu_custom_call.1} parent=1 // pred_check
      _
    $region31: #{tpu_custom_call.1} parent=1 // pred_check_branch
      %219 = sbr.rel (0) target = $region33
    $region32: #{tpu_custom_call.1} parent=1 // pred_region
      %220 = dma.done [#allocation5], 128
    $region33: #{tpu_custom_call.1} parent=1 // pred_fallthru
      _
    %221 = vsyncpa [#allocation4], 1
    %222 = vsyncpa [#allocation7], 1
    %223 = vsyncpa [#allocation5], 1

</llo_original>
